<compile_context>
chip_gen: v6e
topology: v6e:2x2x1
jax: 0.10.0
libtpu: 0.0.40
codegen_flags: <defaults>
</compile_context>

<pallas_src>
import functools

import jax
import jax.numpy as jnp
from jax import lax
from jax.experimental import pallas as pl
from jax.experimental.pallas import tpu as pltpu

EPSILON = 1e-6
_TARGET_TILE_BYTES = 2 << 20  # ~2 MiB per tile
_VMEM_LIMIT_BYTES = 32 << 20


# -----------------------------------------------------------------------------
# Flat path (dim < 128): blocks of shape (tb, dim*dim), lane-dense last axis.
# -----------------------------------------------------------------------------
def _m_sqrt_flat_kernel(x_ref, off_ref, o_ref, *, sign: int, eps: float):
    x = x_ref[...]
    if x.dtype != jnp.float32:
        x = x.astype(jnp.float32)
    off = off_ref[...]                      # (1, L) f32: 1 off-diagonal, 0 on it
    t = x + off                             # == x + 1 - eye
    t = jnp.where(t > 0.0, t, eps)
    if sign == -1:
        y = lax.rsqrt(t)                    # 1/sqrt in a single EUP op
    else:
        y = jnp.sqrt(t)
    o_ref[...] = (y - off).astype(o_ref.dtype)   # == y - 1 + eye


def _m_sqrt_flat(x: jax.Array, sign: int) -> jax.Array:
    n, dim, _ = x.shape
    L = dim * dim
    itemsize = jnp.dtype(x.dtype).itemsize
    row_bytes = L * itemsize

    tb = max(1, _TARGET_TILE_BYTES // row_bytes)
    if tb >= n:
        tb = n                              # block dims equal full array dims
    else:
        tb = max(8, (tb // 8) * 8)          # sublane-aligned batch tile

    x_flat = x.reshape(n, L)
    # (1 - eye) flattened: the only per-element "structure" the op needs.
    off = (1.0 - jnp.eye(dim, dtype=jnp.float32)).reshape(1, L)

    kernel = functools.partial(_m_sqrt_flat_kernel, sign=sign, eps=EPSILON)
    out_flat = pl.pallas_call(
        kernel,
        out_shape=jax.ShapeDtypeStruct((n, L), x.dtype),
        grid_spec=pltpu.PrefetchScalarGridSpec(
            num_scalar_prefetch=0,
            grid=(pl.cdiv(n, tb),),
            in_specs=[
                pl.BlockSpec((tb, L), lambda i: (i, 0)),
                pl.BlockSpec((1, L), lambda i: (0, 0)),   # constant, reused
            ],
            out_specs=pl.BlockSpec((tb, L), lambda i: (i, 0)),
        ),
        compiler_params=pltpu.CompilerParams(
            dimension_semantics=("parallel",),
            vmem_limit_bytes=_VMEM_LIMIT_BYTES,
        ),
    )(x_flat, off)
    return out_flat.reshape(n, dim, dim)


# -----------------------------------------------------------------------------
# 3-D path (dim >= 128): blocks of shape (mb, rb, dim).
# -----------------------------------------------------------------------------
def _m_sqrt_3d_kernel(x_ref, o_ref, *, sign: int, eps: float, rb: int):
    x = x_ref[...]
    if x.dtype != jnp.float32:
        x = x.astype(jnp.float32)
    shape = x.shape
    rows = pl.program_id(1) * rb + lax.broadcasted_iota(jnp.int32, shape, 1)
    cols = lax.broadcasted_iota(jnp.int32, shape, 2)
    off = jnp.where(rows == cols, 0.0, 1.0).astype(jnp.float32)  # 1 - eye
    t = x + off
    t = jnp.where(t > 0.0, t, eps)
    if sign == -1:
        y = lax.rsqrt(t)
    else:
        y = jnp.sqrt(t)
    o_ref[...] = (y - off).astype(o_ref.dtype)


def _m_sqrt_3d(x: jax.Array, sign: int) -> jax.Array:
    n, dim, _ = x.shape
    itemsize = jnp.dtype(x.dtype).itemsize
    row_bytes = dim * dim * itemsize

    if row_bytes <= _TARGET_TILE_BYTES:
        mb = min(n, max(1, _TARGET_TILE_BYTES // row_bytes))
        rb = dim
    else:
        mb = 1
        rb = max(8, (_TARGET_TILE_BYTES // (dim * itemsize)) // 8 * 8)
        rb = min(rb, dim)

    kernel = functools.partial(_m_sqrt_3d_kernel, sign=sign, eps=EPSILON, rb=rb)
    return pl.pallas_call(
        kernel,
        out_shape=jax.ShapeDtypeStruct((n, dim, dim), x.dtype),
        grid_spec=pltpu.PrefetchScalarGridSpec(
            num_scalar_prefetch=0,
            grid=(pl.cdiv(n, mb), pl.cdiv(dim, rb)),
            in_specs=[pl.BlockSpec((mb, rb, dim), lambda b, r: (b, r, 0))],
            out_specs=pl.BlockSpec((mb, rb, dim), lambda b, r: (b, r, 0)),
        ),
        compiler_params=pltpu.CompilerParams(
            dimension_semantics=("parallel", "parallel"),
            vmem_limit_bytes=_VMEM_LIMIT_BYTES,
        ),
    )(x)


# -----------------------------------------------------------------------------
# Public entry point + pure-JAX reference.
# -----------------------------------------------------------------------------
def m_sqrt(x: jax.Array, sign: int) -> jax.Array:
    """Pallas implementation of M_Sqrt.forward.  x: (n, dim, dim), sign: +/-1."""
    n, dim, dim2 = x.shape
    assert dim == dim2, "M_Sqrt expects batches of square matrices"
    if dim < 128:
        return _m_sqrt_flat(x, sign)
    return _m_sqrt_3d(x, sign)


def m_sqrt_ref(x: jax.Array, sign: int) -> jax.Array:
    """Pure-JAX reference mirroring the PyTorch forward exactly."""
    dim = x.shape[1]
    one = jnp.ones_like(x)
    e = jnp.eye(dim, dtype=x.dtype)
    out = x + one - e
    out = jnp.where(out > 0, out, EPSILON * one)
    out = jnp.sqrt(out)
    if sign == -1:
        out = 1.0 / out
    out = out - one + e
    return out


if __name__ == "__main__":
    key = jax.random.PRNGKey(0)
    configs = [(2, 16), (37, 16), (4, 32)]   # small shapes; includes eps branch

    for idx, (n, dim) in enumerate(configs):
        k = jax.random.fold_in(key, idx)
        x = jax.random.uniform(k, (n, dim, dim), dtype=jnp.float32,
                               minval=-0.5, maxval=1.0)
        for sign in (1, -1):
            out = jax.block_until_ready(m_sqrt(x, sign))
            ref = m_sqrt_ref(x, sign)
            assert out.shape == x.shape and out.dtype == x.dtype
            assert jnp.allclose(out, ref, atol=1e-5, rtol=1e-5), (
                f"mismatch for n={n}, dim={dim}, sign={sign}"
            )

    print("KERNEL_OK")
</pallas_src>

<mosaic_0001>
module attributes {stable_mosaic.version = 11 : i64} {
  func.func @_m_sqrt_flat_kernel(%arg0: i32, %arg1: memref<2x256xf32, #tpu.memory_space<vmem>>, %arg2: memref<1x256xf32, #tpu.memory_space<vmem>>, %arg3: memref<2x256xf32, #tpu.memory_space<vmem>>) attributes {dimension_semantics = [#tpu.dimension_semantics<parallel>], iteration_bounds = array<i64: 1>, scalar_prefetch = 0 : i64, scratch_operands = 0 : i64, tpu.core_type = #tpu.core_type<tc>, window_params = [{transform_indices = @transform_0, window_bounds = array<i64: 2, 256>}, {pipeline_mode = #tpu.pipeline_mode<synchronous>, transform_indices = @transform_1, window_bounds = array<i64: 1, 256>}, {transform_indices = @transform_2, window_bounds = array<i64: 2, 256>}]} {
    %c0 = arith.constant 0 : index
    %c0_0 = arith.constant 0 : index
    %0 = vector.load %arg1[%c0, %c0_0] : memref<2x256xf32, #tpu.memory_space<vmem>>, vector<2x256xf32>
    %c0_1 = arith.constant 0 : index
    %c0_2 = arith.constant 0 : index
    %1 = vector.load %arg2[%c0_1, %c0_2] : memref<1x256xf32, #tpu.memory_space<vmem>>, vector<1x256xf32>
    %2 = vector.broadcast %1 : vector<1x256xf32> to vector<2x256xf32>
    %3 = arith.addf %0, %2 : vector<2x256xf32>
    %cst = arith.constant 0.000000e+00 : f32
    %4 = vector.broadcast %cst : f32 to vector<2x256xf32>
    %5 = arith.cmpf ogt, %3, %4 : vector<2x256xf32>
    %cst_3 = arith.constant 9.99999997E-7 : f32
    %6 = vector.broadcast %cst_3 : f32 to vector<2x256xf32>
    %7 = arith.select %5, %3, %6 : vector<2x256xi1>, vector<2x256xf32>
    %8 = math.sqrt %7 : vector<2x256xf32>
    %9 = vector.broadcast %1 : vector<1x256xf32> to vector<2x256xf32>
    %10 = arith.subf %8, %9 : vector<2x256xf32>
    %c0_4 = arith.constant 0 : index
    %c0_5 = arith.constant 0 : index
    %11 = vector.load %arg3[%c0_4, %c0_5] : memref<2x256xf32, #tpu.memory_space<vmem>>, vector<2x256xf32>
    tpu.vector_store %arg3[%c0_4, %c0_5], %10 {strides = array<i32>} : memref<2x256xf32, #tpu.memory_space<vmem>>, vector<2x256xf32>,
    return
  }
  func.func @transform_0(%arg0: i32) -> (i32, i32) {
    %c0_i32 = arith.constant 0 : i32
    %c0_i32_0 = arith.constant 0 : i32
    return %arg0, %c0_i32 : i32, i32
  }
  func.func @transform_1(%arg0: i32) -> (i32, i32) {
    %c0_i32 = arith.constant 0 : i32
    %c0_i32_0 = arith.constant 0 : i32
    %c0_i32_1 = arith.constant 0 : i32
    return %c0_i32, %c0_i32_0 : i32, i32
  }
  func.func @transform_2(%arg0: i32) -> (i32, i32) {
    %c0_i32 = arith.constant 0 : i32
    %c0_i32_0 = arith.constant 0 : i32
    return %arg0, %c0_i32 : i32, i32
  }
}

</mosaic_0001>

<llo_original>
// kernel: tpu_custom_call.1
$region0: #{tpu_custom_call.1}
  #allocation0 [shape = 'u32[]', space=smem, size = 0x4, offset = 0x4, fixed_abs, tag = 'smem constant byte address 0x4 - core index']
  #allocation1 [shape = 'u32[144,128]{1,0:T(1,128)}', space=vmem, size = 0x12000, scoped, tag = 'internal scratch']
  %s0 = inlined_call_operand.hbm [shape: f32[2,256], index: 0, kind: input, shape index: {}]
  %s1 = inlined_call_operand.hbm [shape: f32[1,256], index: 1, kind: input, shape index: {}]
  %s2 = inlined_call_operand.hbm [shape: f32[2,256], index: 2, kind: output, shape index: {}]
  %s3 = sld [smem:[#allocation0]]
  $region26: #{tpu_custom_call.1} parent=0
    _
  %s5 = ssub.s32 1, %s3
  %s6 = scalar_select 0, %s5, %s3
  $region1: #{tpu_custom_call.1} parent=0
    #allocation2 [shape = 'u8[2048]{0}', space=vmem, size = 0x800, scoped, tag = 'input window, operand 0, single buffered']
    #allocation3 [shape = 's32[1]{0}', space=sflag, size = 0x4, scoped, tag = 'scoped memory for tpu_custom_call.1']
    #allocation4 [shape = 's32[1]{0}', space=sflag, size = 0x4, scoped, tag = 'scoped memory for tpu_custom_call.1']
    #allocation5 [shape = 'u8[1024]{0}', space=vmem, size = 0x400, scoped, tag = 'input window, operand 1, single buffered']
    #allocation6 [shape = 's32[1]{0}', space=sflag, size = 0x4, scoped, tag = 'scoped memory for tpu_custom_call.1']
    #allocation7 [shape = 'u8[2048]{0}', space=vmem, size = 0x800, scoped, tag = 'output window, operand 0, single buffered']
    %7 = vsyncpa [#allocation3], 0
    %8 = vsyncpa [#allocation6], 0
    %9 = vsyncpa [#allocation4], 0
    // Predicated region
    $region2: #{tpu_custom_call.1} parent=1 // pred_check
      _
    $region3: #{tpu_custom_call.1} parent=1 // pred_check_branch
      %11 = sbr.rel (0) target = $region5
    $region4: #{tpu_custom_call.1} parent=1 // pred_region
      %s13 = ssub.s32 64, 64
      %14 = vsyncadd [#allocation3], %s13
      %s16 = sshll.u32 [#allocation2], 4
      %s17 = int_to_ptr.vmem [resolvable:$true] %s16
      %19 = dma.hbm_to_vmem [thread:$0]  %s0, 64, %s17, [#allocation3]
    $region5: #{tpu_custom_call.1} parent=1 // pred_fallthru
      _
    // Predicated region
    $region6: #{tpu_custom_call.1} parent=1 // pred_check
      _
    $region7: #{tpu_custom_call.1} parent=1 // pred_check_branch
      %21 = sbr.rel (0) target = $region9
    $region8: #{tpu_custom_call.1} parent=1 // pred_region
      %s23 = ssub.s32 32, 32
      %24 = vsyncadd [#allocation6], %s23
      %s26 = sshll.u32 [#allocation5], 4
      %s27 = int_to_ptr.vmem [resolvable:$true] %s26
      %29 = dma.hbm_to_vmem [thread:$0]  %s1, 32, %s27, [#allocation6]
    $region9: #{tpu_custom_call.1} parent=1 // pred_fallthru
      _
    // Predicated region
    $region10: #{tpu_custom_call.1} parent=1 // pred_check
      _
    $region11: #{tpu_custom_call.1} parent=1 // pred_check_branch
      %31 = sbr.rel (0) target = $region13
    $region12: #{tpu_custom_call.1} parent=1 // pred_region
      %32 = dma.done [#allocation3], 64
    $region13: #{tpu_custom_call.1} parent=1 // pred_fallthru
      _
    // Predicated region
    $region14: #{tpu_custom_call.1} parent=1 // pred_check
      _
    $region15: #{tpu_custom_call.1} parent=1 // pred_check_branch
      %34 = sbr.rel (0) target = $region17
    $region16: #{tpu_custom_call.1} parent=1 // pred_region
      %35 = dma.done [#allocation6], 32
    $region17: #{tpu_custom_call.1} parent=1 // pred_fallthru
      _
    %v36 = vld [vmem:[#allocation2] sm:$0xf]
    %v37 = vld [vmem:[#allocation5] sm:$0x3]
    %v39 = vlaneseq
    %v40 = vshrl.u32 %v39, 7
    %v41 = vsub.s32 0, %v40
    %v42 = vrot.slane %v37, %v41
    %v43 = vlaneseq
    %v44 = vshrl.u32 %v43, 7
    %v45 = vsub.s32 1, %v44
    %v46 = vrot.slane %v37, %v45
    %v47 = vcombine.low %v42, %v46
    %v49 = vunpack.c.l.s4 1983009808
    %v50 = vunpack.c.0.s8 %v49
    %v51 = vlaneseq
    %v52 = vshrl.u32 %v51, 7
    %v53 = vsub.s32 %v50, %v52
    %v54 = vrot.slane %v47, %v53
    %v56 = vadd.f32 %v36, %v54
    %vm57 = vcmp.gt.f32.partialorder %v56, 0.0
    %v58 = vsel %vm57, %v56, 1e-06
    %v59 = vrsqrt.pop %v58
    %v60 = vmul.f32 %v58, %v59
    %vm61 = vcmp.eq.f32.partialorder %v58, inf
    %v62 = vsel %vm61, %v58, %v60
    %vm63 = vcmp.eq.f32.partialorder %v58, 0.0
    %v64 = vand.u32 %v58, 2147483648
    %v65 = vsel %vm63, %v64, %v62
    %v66 = vsub.f32 %v65, %v54
    %67 = vst [vmem:[#allocation7] sm:$0xf] %v66
    // Predicated region
    $region18: #{tpu_custom_call.1} parent=1 // pred_check
      _
    $region19: #{tpu_custom_call.1} parent=1 // pred_check_branch
      %69 = sbr.rel (0) target = $region21
    $region20: #{tpu_custom_call.1} parent=1 // pred_region
      %s71 = ssub.s32 64, 64
      %72 = vsyncadd [#allocation4], %s71
      %s74 = sshll.u32 [#allocation7], 4
      %s75 = int_to_ptr.vmem [resolvable:$true] %s74
      %77 = dma.vmem_to_hbm [thread:$0]  %s75, 64, %s2, [#allocation4]
    $region21: #{tpu_custom_call.1} parent=1 // pred_fallthru
      _
    // Predicated region
    $region22: #{tpu_custom_call.1} parent=1 // pred_check
      _
    $region23: #{tpu_custom_call.1} parent=1 // pred_check_branch
      %79 = sbr.rel (0) target = $region25
    $region24: #{tpu_custom_call.1} parent=1 // pred_region
      %80 = dma.done [#allocation4], 64
    $region25: #{tpu_custom_call.1} parent=1 // pred_fallthru
      _
    %81 = vsyncpa [#allocation3], 1
    %82 = vsyncpa [#allocation6], 1
    %83 = vsyncpa [#allocation4], 1

</llo_original>
